<compile_context>
chip_gen: v7x
topology: tpu7x:2x2x1
jax: 0.10.0
libtpu: 0.0.40
codegen_flags: <defaults>
</compile_context>

<pallas_src>
import numpy as np
import jax
import jax.numpy as jnp
from jax.experimental import pallas as pl
from jax.experimental.pallas import tpu as pltpu

DROPOUT_P = 0.1
_TARGET_BLOCK_BYTES = 1 << 20  # ~1 MiB per block


def _build_pe(d_model: int, max_len: int = 5000) -> jnp.ndarray:
    """Sinusoidal positional-encoding table, shape (1, max_len, d_model)."""
    position = jnp.arange(max_len, dtype=jnp.float32)[:, None]
    div_term = jnp.exp(
        jnp.arange(0, d_model, 2, dtype=jnp.float32) * (-np.log(10000.0) / d_model)
    )
    pe = jnp.zeros((max_len, d_model), dtype=jnp.float32)
    pe = pe.at[:, 0::2].set(jnp.sin(position * div_term))
    pe = pe.at[:, 1::2].set(jnp.cos(position * div_term))
    return pe[None]  # (1, max_len, d_model)


def _choose_row_tile(num_rows: int, row_bytes: int) -> int:
    """Largest row-tile that divides num_rows, is a multiple of 8 (or the full
    extent), and keeps the block around _TARGET_BLOCK_BYTES."""
    if num_rows * row_bytes <= _TARGET_BLOCK_BYTES:
        return num_rows
    cands = [
        t
        for t in range(8, num_rows + 1, 8)
        if num_rows % t == 0 and t * row_bytes <= _TARGET_BLOCK_BYTES
    ]
    return max(cands) if cands else num_rows


def positional_encoding(
    x: jnp.ndarray,
    pe: jnp.ndarray,
    *,
    dropout_p: float = DROPOUT_P,
    training: bool = True,
    key=None,
) -> jnp.ndarray:
    """x: (B, S, D), pe: (1, max_len, D).  Returns (B, S, D), same dtype as x."""
    B, S, D = x.shape
    pe_slice = pe[0, :S, :].astype(x.dtype)  # (S, D), cast once in the wrapper

    # --- lane-dense folding: present a 128-wide last dim whenever possible ----
    M = S * D
    if M % 128 == 0:
        L = 128
        R = M // L
        x2 = x.reshape(B, R, L)
        pe2 = pe_slice.reshape(R, L)
    else:
        R, L = S, D
        x2 = x
        pe2 = pe_slice

    itemsize = np.dtype(x.dtype).itemsize
    tile_r = _choose_row_tile(R, L * itemsize)
    n_r = R // tile_r
    grid = (n_r, B)  # pe tile (depends only on r) is fetched once per r-tile

    x_spec = pl.BlockSpec((1, tile_r, L), lambda r, b: (b, r, 0))
    pe_spec = pl.BlockSpec((tile_r, L), lambda r, b: (r, 0))
    out_spec = pl.BlockSpec((1, tile_r, L), lambda r, b: (b, r, 0))

    compiler_params = pltpu.CompilerParams(
        dimension_semantics=("parallel", "parallel"),
    )

    apply_dropout = training and dropout_p > 0.0

    if apply_dropout:
        if key is None:
            key = jax.random.PRNGKey(0)
        bits = jax.random.bits(key, (B, R, L), dtype=jnp.uint32)
        threshold = np.uint32(min(int(dropout_p * (2**32)), 2**32 - 1))
        scale = float(1.0 / (1.0 - dropout_p))

        def kernel(x_ref, pe_ref, bits_ref, o_ref):
            y = x_ref[...] + pe_ref[...]            # (1,T,L) + (T,L) broadcast
            keep = (bits_ref[...] >= threshold).astype(y.dtype)
            o_ref[...] = (y * (keep * scale)).astype(o_ref.dtype)

        cost = pl.CostEstimate(
            flops=3 * B * R * L,
            transcendentals=0,
            bytes_accessed=(2 * B * R * L + R * L) * itemsize + B * R * L * 4,
        )
        out = pl.pallas_call(
            kernel,
            out_shape=jax.ShapeDtypeStruct((B, R, L), x.dtype),
            grid=grid,
            in_specs=[x_spec, pe_spec,
                      pl.BlockSpec((1, tile_r, L), lambda r, b: (b, r, 0))],
            out_specs=out_spec,
            compiler_params=compiler_params,
            cost_estimate=cost,
        )(x2, pe2, bits)
    else:
        def kernel(x_ref, pe_ref, o_ref):
            o_ref[...] = (x_ref[...] + pe_ref[...]).astype(o_ref.dtype)

        cost = pl.CostEstimate(
            flops=B * R * L,
            transcendentals=0,
            bytes_accessed=(2 * B * R * L + R * L) * itemsize,
        )
        out = pl.pallas_call(
            kernel,
            out_shape=jax.ShapeDtypeStruct((B, R, L), x.dtype),
            grid=grid,
            in_specs=[x_spec, pe_spec],
            out_specs=out_spec,
            compiler_params=compiler_params,
            cost_estimate=cost,
        )(x2, pe2)

    return out.reshape(B, S, D)


if __name__ == "__main__":
    B, S, D = 2, 8, 32  # batch, seq, d_model
    key = jax.random.PRNGKey(0)
    k_x, k_drop = jax.random.split(key)
    x = jax.random.normal(k_x, (B, S, D), dtype=jnp.float32)

    pe = _build_pe(d_model=D, max_len=5000)

    # Training path: add + dropout(p=0.1)
    out_train = positional_encoding(x, pe, training=True, key=k_drop)
    out_train = jax.block_until_ready(out_train)
    assert out_train.shape == (B, S, D) and out_train.dtype == jnp.float32

    # Eval path: pure add (nn.Dropout is a no-op in eval) — verify numerically.
    out_eval = positional_encoding(x, pe, training=False)
    out_eval = jax.block_until_ready(out_eval)
    ref = x + pe[:, :S, :]
    assert out_eval.shape == (B, S, D) and out_eval.dtype == jnp.float32
    np.testing.assert_allclose(np.asarray(out_eval), np.asarray(ref), atol=1e-6)

    print("KERNEL_OK")
</pallas_src>

<mosaic_0001>
module attributes {stable_mosaic.version = 11 : i64} {
  func.func @kernel(%arg0: i32, %arg1: i32, %arg2: memref<1x2x128xf32, #tpu.memory_space<vmem>>, %arg3: memref<2x128xf32, #tpu.memory_space<vmem>>, %arg4: memref<1x2x128xi32, #tpu.memory_space<vmem>>, %arg5: memref<1x2x128xf32, #tpu.memory_space<vmem>>) attributes {dimension_semantics = [#tpu.dimension_semantics<parallel>, #tpu.dimension_semantics<parallel>], iteration_bounds = array<i64: 1, 2>, scalar_prefetch = 0 : i64, scratch_operands = 0 : i64, tpu.core_type = #tpu.core_type<tc>, window_params = [{transform_indices = @transform_0, window_bounds = array<i64: 1, 2, 128>}, {transform_indices = @transform_1, window_bounds = array<i64: 2, 128>}, {transform_indices = @transform_2, window_bounds = array<i64: 1, 2, 128>}, {transform_indices = @transform_3, window_bounds = array<i64: 1, 2, 128>}]} {
    %c0 = arith.constant 0 : index
    %c0_0 = arith.constant 0 : index
    %c0_1 = arith.constant 0 : index
    %0 = vector.load %arg2[%c0, %c0_0, %c0_1] : memref<1x2x128xf32, #tpu.memory_space<vmem>>, vector<1x2x128xf32>
    %c0_2 = arith.constant 0 : index
    %c0_3 = arith.constant 0 : index
    %1 = vector.load %arg3[%c0_2, %c0_3] : memref<2x128xf32, #tpu.memory_space<vmem>>, vector<2x128xf32>
    %2 = vector.shape_cast %1 : vector<2x128xf32> to vector<1x2x128xf32>
    %3 = arith.addf %0, %2 : vector<1x2x128xf32>
    %c0_4 = arith.constant 0 : index
    %c0_5 = arith.constant 0 : index
    %c0_6 = arith.constant 0 : index
    %4 = vector.load %arg4[%c0_4, %c0_5, %c0_6] : memref<1x2x128xi32, #tpu.memory_space<vmem>>, vector<1x2x128xi32>
    %c429496729_i32 = arith.constant 429496729 : i32
    %5 = vector.broadcast %c429496729_i32 : i32 to vector<1x2x128xi32>
    %6 = arith.cmpi uge, %4, %5 : vector<1x2x128xi32>
    %7 = arith.extui %6 : vector<1x2x128xi1> to vector<1x2x128xi32>
    %8 = arith.sitofp %7 : vector<1x2x128xi32> to vector<1x2x128xf32>
    %cst = arith.constant 1.11111116 : f32
    %9 = vector.broadcast %cst : f32 to vector<1x2x128xf32>
    %10 = arith.mulf %8, %9 : vector<1x2x128xf32>
    %11 = arith.mulf %3, %10 : vector<1x2x128xf32>
    %c0_7 = arith.constant 0 : index
    %c0_8 = arith.constant 0 : index
    %c0_9 = arith.constant 0 : index
    %12 = vector.load %arg5[%c0_7, %c0_8, %c0_9] : memref<1x2x128xf32, #tpu.memory_space<vmem>>, vector<1x2x128xf32>
    tpu.vector_store %arg5[%c0_7, %c0_8, %c0_9], %11 {strides = array<i32>} : memref<1x2x128xf32, #tpu.memory_space<vmem>>, vector<1x2x128xf32>,
    return
  }
  func.func @transform_0(%arg0: i32, %arg1: i32) -> (i32, i32, i32) {
    %c0_i32 = arith.constant 0 : i32
    %c0_i32_0 = arith.constant 0 : i32
    return %arg1, %arg0, %c0_i32 : i32, i32, i32
  }
  func.func @transform_1(%arg0: i32, %arg1: i32) -> (i32, i32) {
    %c0_i32 = arith.constant 0 : i32
    %c0_i32_0 = arith.constant 0 : i32
    return %arg0, %c0_i32 : i32, i32
  }
  func.func @transform_2(%arg0: i32, %arg1: i32) -> (i32, i32, i32) {
    %c0_i32 = arith.constant 0 : i32
    %c0_i32_0 = arith.constant 0 : i32
    return %arg1, %arg0, %c0_i32 : i32, i32, i32
  }
  func.func @transform_3(%arg0: i32, %arg1: i32) -> (i32, i32, i32) {
    %c0_i32 = arith.constant 0 : i32
    %c0_i32_0 = arith.constant 0 : i32
    return %arg1, %arg0, %c0_i32 : i32, i32, i32
  }
}

</mosaic_0001>

<llo_original>
// kernel: tpu_custom_call.1
$region0: #{tpu_custom_call.1}
  #allocation0 [shape = 'u32[]', space=smem, size = 0x4, offset = 0x4, fixed_abs, tag = 'smem constant byte address 0x4 - core index']
  #allocation1 [shape = 'u32[144,128]{1,0:T(1,128)}', space=vmem, size = 0x12000, scoped, tag = 'internal scratch']
  %s0 = inlined_call_operand.hbm [shape: f32[2,2,128], index: 0, kind: input, shape index: {}]
  %s1 = inlined_call_operand.vmem [shape: f32[2,128], index: 1, kind: input, shape index: {}]
  %s2 = inlined_call_operand.vmem [shape: u32[2,2,128], index: 2, kind: input, shape index: {}]
  %s3 = inlined_call_operand.hbm [shape: f32[2,2,128], index: 3, kind: output, shape index: {}]
  %s4 = sld [smem:[#allocation0]]
  $region49: #{tpu_custom_call.1} parent=0
    _
  %s6 = ssub.s32 1, %s4
  %s7 = scalar_select 0, %s6, %s4
  $region1: #{tpu_custom_call.1} parent=0
    #allocation2 [shape = 'u8[2048]{0}', space=vmem, size = 0x800, scoped, tag = 'input window, operand 0']
    #allocation3 [shape = 's32[2]{0}', space=sflag, size = 0x8, scoped, tag = 'scoped memory for tpu_custom_call.1']
    #allocation4 [shape = 's32[2]{0}', space=sflag, size = 0x8, scoped, tag = 'scoped memory for tpu_custom_call.1']
    #allocation5 [shape = 'u8[2048]{0}', space=vmem, size = 0x800, scoped, tag = 'output window, operand 0']
    %8 = vsyncpa [#allocation3], 0
    %s9 = scalar_lea.sflag [#allocation3], 1
    %10 = vsyncpa %s9, 0
    %11 = vsyncpa [#allocation4], 0
    %s12 = scalar_lea.sflag [#allocation4], 1
    %13 = vsyncpa %s12, 0
    loop: start=0, step=1, limit=4
    $region2: #{tpu_custom_call.1} parent=1 // loop_pre_header
      _
    $region3: #{tpu_custom_call.1} parent=1 // loop_header
      %s15 = sphi 0, %s19
      %p16 = scmp.ge.s32.totalorder %s15, 4
      %s22 = sphi 0, %s34
      %s23 = sphi 0, %s30
      %s24 = sphi 0, %s22
      %s25 = sphi 0, %s23
      %s26 = sphi 0, %s24
      %s27 = sphi 0, %s25
      %s39 = sphi 0, %s41
      %s42 = sphi 0, %s39
      %s43 = sphi 0, %s42
      %s59 = sphi 0, %s43
      %s65 = sphi 0, %s67
      %s68 = sphi 0, %s65
      %s69 = sphi 0, %s68
      %s85 = sphi 0, %s69
      %s93 = sphi 0, %s95
      %s96 = sphi 0, %s93
      %s97 = sphi 0, %s96
      %s113 = sphi 0, %s97
      %s121 = sphi 0, %s123
      %s124 = sphi 0, %s121
      %s125 = sphi 0, %s124
      %s141 = sphi 0, %s125
    $region4: #{tpu_custom_call.1} parent=1 // loop_header_branch
      %18 = sbr.rel (%p16) target = $region8
    $region5: #{tpu_custom_call.1} parent=1 // loop_body
      %s20 = ssub.s32 %s15, 1
      %s21 = ssub.s32 %s15, 2
      %s28 = sadd.s32 1, %s23
      %p29 = scmp.ge.s32.totalorder %s28, 2
      %s30 = scalar_select %p29, 0, %s28
      %s31 = sadd.s32 1, %s22
      %s32 = scalar_select %p29, %s31, %s22
      %p33 = scmp.ge.s32.totalorder %s32, 1
      %s34 = scalar_select %p33, 0, %s32
      %s35 = ssub.s32 %s23, %s30
      %s36 = ssub.s32 %s22, %s34
      %s37 = sor.u32 %s35, %s36
      %p38 = scmp.eq.s32.totalorder %s37, 0
      %s40 = sadd.s32 %s39, 1
      %s41 = scalar_select %p38, %s39, %s40
      %p44 = pneg %p38
      %p45 = scmp.eq.s32.totalorder %s15, 1
      %p46 = por %p44, %p45
      %p47 = scmp.ne.s32.totalorder %s39, %s42
      %p48 = scmp.eq.s32.totalorder %s15, 0
      %p49 = por %p47, %p48
      %p50 = scmp.ne.s32.totalorder %s39, %s42
      %p51 = scmp.eq.s32.totalorder %s20, 1
      %p52 = por %p50, %p51
      %p53 = scmp.ne.s32.totalorder %s42, %s43
      %p54 = scmp.eq.s32.totalorder %s20, 0
      %p55 = por %p53, %p54
      %p56 = scmp.ne.s32.totalorder %s42, %s43
      %p57 = scmp.eq.s32.totalorder %s21, 1
      %p58 = por %p56, %p57
      %p60 = scmp.ne.s32.totalorder %s43, %s59
      %p61 = scmp.eq.s32.totalorder %s21, 0
      %p62 = por %p60, %p61
      %s63 = ssub.s32 %s22, %s34
      %p64 = scmp.eq.s32.totalorder %s63, 0
      %s66 = sadd.s32 %s65, 1
      %s67 = scalar_select %p64, %s65, %s66
      %p70 = pneg %p64
      %p71 = scmp.eq.s32.totalorder %s15, 1
      %p72 = por %p70, %p71
      %p73 = scmp.ne.s32.totalorder %s65, %s68
      %p74 = scmp.eq.s32.totalorder %s15, 0
      %p75 = por %p73, %p74
      %p76 = scmp.ne.s32.totalorder %s65, %s68
      %p77 = scmp.eq.s32.totalorder %s20, 1
      %p78 = por %p76, %p77
      %p79 = scmp.ne.s32.totalorder %s68, %s69
      %p80 = scmp.eq.s32.totalorder %s20, 0
      %p81 = por %p79, %p80
      %p82 = scmp.ne.s32.totalorder %s68, %s69
      %p83 = scmp.eq.s32.totalorder %s21, 1
      %p84 = por %p82, %p83
      %p86 = scmp.ne.s32.totalorder %s69, %s85
      %p87 = scmp.eq.s32.totalorder %s21, 0
      %p88 = por %p86, %p87
      %s89 = ssub.s32 %s23, %s30
      %s90 = ssub.s32 %s22, %s34
      %s91 = sor.u32 %s89, %s90
      %p92 = scmp.eq.s32.totalorder %s91, 0
      %s94 = sadd.s32 %s93, 1
      %s95 = scalar_select %p92, %s93, %s94
      %p98 = pneg %p92
      %p99 = scmp.eq.s32.totalorder %s15, 1
      %p100 = por %p98, %p99
      %p101 = scmp.ne.s32.totalorder %s93, %s96
      %p102 = scmp.eq.s32.totalorder %s15, 0
      %p103 = por %p101, %p102
      %p104 = scmp.ne.s32.totalorder %s93, %s96
      %p105 = scmp.eq.s32.totalorder %s20, 1
      %p106 = por %p104, %p105
      %p107 = scmp.ne.s32.totalorder %s96, %s97
      %p108 = scmp.eq.s32.totalorder %s20, 0
      %p109 = por %p107, %p108
      %p110 = scmp.ne.s32.totalorder %s96, %s97
      %p111 = scmp.eq.s32.totalorder %s21, 1
      %p112 = por %p110, %p111
      %p114 = scmp.ne.s32.totalorder %s97, %s113
      %p115 = scmp.eq.s32.totalorder %s21, 0
      %p116 = por %p114, %p115
      %s117 = ssub.s32 %s23, %s30
      %s118 = ssub.s32 %s22, %s34
      %s119 = sor.u32 %s117, %s118
      %p120 = scmp.eq.s32.totalorder %s119, 0
      %s122 = sadd.s32 %s121, 1
      %s123 = scalar_select %p120, %s121, %s122
      %p126 = pneg %p120
      %p127 = scmp.eq.s32.totalorder %s15, 1
      %p128 = por %p126, %p127
      %p129 = scmp.ne.s32.totalorder %s121, %s124
      %p130 = scmp.eq.s32.totalorder %s15, 0
      %p131 = por %p129, %p130
      %p132 = scmp.ne.s32.totalorder %s121, %s124
      %p133 = scmp.eq.s32.totalorder %s20, 1
      %p134 = por %p132, %p133
      %p135 = scmp.ne.s32.totalorder %s124, %s125
      %p136 = scmp.eq.s32.totalorder %s20, 0
      %p137 = por %p135, %p136
      %p138 = scmp.ne.s32.totalorder %s124, %s125
      %p139 = scmp.eq.s32.totalorder %s21, 1
      %p140 = por %p138, %p139
      %p142 = scmp.ne.s32.totalorder %s125, %s141
      %p143 = scmp.eq.s32.totalorder %s21, 0
      %p144 = por %p142, %p143
      %p145 = scmp.le.s32.totalorder 1, %s15
      %p146 = scmp.lt.s32.totalorder %s15, 3
      %p147 = pnand %p145, %p146
      %p148 = pneg %p147
      // Predicated region
      $region9: #{tpu_custom_call.1} parent=5 // pred_check
        _
      $region10: #{tpu_custom_call.1} parent=5 // pred_check_branch
        %150 = sbr.rel (%p147) target = $region12
      $region11: #{tpu_custom_call.1} parent=5 // pred_region
        %s151 = ssub.s32 %s15, 1
        // Predicated region
        $region13: #{tpu_custom_call.1} parent=11 // pred_check
          %p152 = pneg %p81
        $region14: #{tpu_custom_call.1} parent=11 // pred_check_branch
          %154 = sbr.rel (%p152) target = $region16
        $region15: #{tpu_custom_call.1} parent=11 // pred_region
          %p155 = scmp.lt.s32.totalorder %s24, 0
          %s156 = scalar_select %p155, %s24, 0
          %s157 = smul.addr %s156, 2
          %s158 = scalar_lea.vmem %s1, %s157
        $region16: #{tpu_custom_call.1} parent=11 // pred_fallthru
          _
      $region12: #{tpu_custom_call.1} parent=5 // pred_fallthru
        _
      %p159 = scmp.lt.s32.totalorder %s15, 2
      // Predicated region
      $region17: #{tpu_custom_call.1} parent=5 // pred_check
        %p160 = pneg %p159
      $region18: #{tpu_custom_call.1} parent=5 // pred_check_branch
        %162 = sbr.rel (%p160) target = $region20
      $region19: #{tpu_custom_call.1} parent=5 // pred_region
        // Predicated region
        $region21: #{tpu_custom_call.1} parent=19 // pred_check
          %p163 = pneg %p49
        $region22: #{tpu_custom_call.1} parent=19 // pred_check_branch
          %165 = sbr.rel (%p163) target = $region24
        $region23: #{tpu_custom_call.1} parent=19 // pred_region
          %s166 = sand.u32 %s39, 1
          %s167 = scalar_lea.sflag [#allocation3], %s166
          %s168 = sand.u32 %s39, 1
          %s169 = smul.addr %s168, 2
          %s170 = scalar_lea.vmem [#allocation2], %s169
          %s172 = ssub.s32 32, 32
          %173 = vsyncadd %s167, %s172
          %s174 = sadd.s32 %s22, %s23
          %s175 = smul.addr %s174, 32
          %s176 = scalar_lea.hbm %s0, %s175
          %s178 = sshll.u32 %s170, 4
          %s179 = int_to_ptr.vmem [resolvable:$true] %s178
          %181 = dma.hbm_to_vmem [thread:$0]  %s176, 32, %s179, %s167
        $region24: #{tpu_custom_call.1} parent=19 // pred_fallthru
          _
        // Predicated region
        $region25: #{tpu_custom_call.1} parent=19 // pred_check
          %p182 = pneg %p103
        $region26: #{tpu_custom_call.1} parent=19 // pred_check_branch
          %184 = sbr.rel (%p182) target = $region28
        $region27: #{tpu_custom_call.1} parent=19 // pred_region
          %p185 = scmp.lt.s32.totalorder %s23, 1
          %s186 = scalar_select %p185, %s23, 1
          %p187 = scmp.lt.s32.totalorder %s22, 0
          %s188 = scalar_select %p187, %s22, 0
          %s189 = sadd.s32 %s188, %s186
          %s190 = smul.addr %s189, 2
          %s191 = scalar_lea.vmem %s2, %s190
        $region28: #{tpu_custom_call.1} parent=19 // pred_fallthru
          _
      $region20: #{tpu_custom_call.1} parent=5 // pred_fallthru
        _
      %p192 = scmp.le.s32.totalorder 1, %s15
      %p193 = scmp.lt.s32.totalorder %s15, 3
      %p194 = pnand %p192, %p193
      %p195 = pneg %p194
      // Predicated region
      $region29: #{tpu_custom_call.1} parent=5 // pred_check
        _
      $region30: #{tpu_custom_call.1} parent=5 // pred_check_branch
        %197 = sbr.rel (%p194) target = $region32
      $region31: #{tpu_custom_call.1} parent=5 // pred_region
        %s198 = ssub.s32 %s15, 1
        %s199 = sand.u32 %s42, 1
        %s200 = scalar_lea.sflag [#allocation3], %s199
        %s201 = sand.u32 %s42, 1
        %s202 = smul.addr %s201, 2
        %s203 = scalar_lea.vmem [#allocation2], %s202
        // Predicated region
        $region33: #{tpu_custom_call.1} parent=31 // pred_check
          %p204 = pneg %p55
        $region34: #{tpu_custom_call.1} parent=31 // pred_check_branch
          %206 = sbr.rel (%p204) target = $region36
        $region35: #{tpu_custom_call.1} parent=31 // pred_region
          %207 = dma.done %s200, 32
        $region36: #{tpu_custom_call.1} parent=31 // pred_fallthru
          _
        %s208 = sand.u32 %s42, 1
        %s209 = scalar_lea.sflag [#allocation3], %s208
        %s210 = sand.u32 %s42, 1
        %s211 = smul.addr %s210, 2
        %s212 = scalar_lea.vmem [#allocation2], %s211
        %p213 = pneg %p55
        %p214 = pneg %p52
        %p215 = scmp.lt.s32.totalorder %s24, 0
        %s216 = scalar_select %p215, %s24, 0
        %s217 = smul.addr %s216, 2
        %s218 = scalar_lea.vmem %s1, %s217
        %p219 = pneg %p81
        %p220 = pneg %p78
        %p221 = scmp.lt.s32.totalorder %s25, 1
        %s222 = scalar_select %p221, %s25, 1
        %p223 = scmp.lt.s32.totalorder %s24, 0
        %s224 = scalar_select %p223, %s24, 0
        %s225 = sadd.s32 %s224, %s222
        %s226 = smul.addr %s225, 2
        %s227 = scalar_lea.vmem %s2, %s226
        %p228 = pneg %p109
        %p229 = pneg %p106
        %p230 = pneg %p137
        %p231 = pneg %p134
        %s232 = sand.u32 %s124, 1
        %s233 = scalar_lea.sflag [#allocation4], %s232
        %s234 = sand.u32 %s124, 1
        %s235 = smul.addr %s234, 2
        %s236 = scalar_lea.vmem [#allocation5], %s235
        %p237 = scmp.lt.s32.totalorder %s24, 0
        %s238 = scalar_select %p237, %s24, 0
        %s239 = smul.addr %s238, 2
        %s240 = scalar_lea.vmem %s1, %s239
        %p241 = scmp.lt.s32.totalorder %s25, 1
        %s242 = scalar_select %p241, %s25, 1
        %p243 = scmp.lt.s32.totalorder %s24, 0
        %s244 = scalar_select %p243, %s24, 0
        %s245 = sadd.s32 %s244, %s242
        %s246 = smul.addr %s245, 2
        %s247 = scalar_lea.vmem %s2, %s246
        %v248 = vld [vmem:[%s203] sm:$0x3]
        %v249 = vld [vmem:[%s240] sm:$0x3]
        %v250 = vadd.f32 %v248, %v249
        %v251 = vld [vmem:[%s247] sm:$0x3]
        %vm252 = vcmp.ge.u32.totalorder %v251, 429496729
        %v253 = vsel %vm252, 1, 0
        %v254 = vcvt.s32.f32 %v253
        %v255 = vmul.f32 %v254, 1.1111112
        %v256 = vmul.f32 %v250, %v255
        %257 = vst [vmem:[%s236] sm:$0x3] %v256
        %s258 = sand.u32 %s124, 1
        %s259 = scalar_lea.sflag [#allocation4], %s258
        %s260 = sand.u32 %s124, 1
        %s261 = smul.addr %s260, 2
        %s262 = scalar_lea.vmem [#allocation5], %s261
        // Predicated region
        $region37: #{tpu_custom_call.1} parent=31 // pred_check
          %p263 = pneg %p134
        $region38: #{tpu_custom_call.1} parent=31 // pred_check_branch
          %265 = sbr.rel (%p263) target = $region40
        $region39: #{tpu_custom_call.1} parent=31 // pred_region
          %s267 = ssub.s32 32, 32
          %268 = vsyncadd %s259, %s267
          %s269 = sadd.s32 %s24, %s25
          %s270 = smul.addr %s269, 32
          %s271 = scalar_lea.hbm %s3, %s270
          %s273 = sshll.u32 %s262, 4
          %s274 = int_to_ptr.vmem [resolvable:$true] %s273
          %276 = dma.vmem_to_hbm [thread:$0]  %s274, 32, %s271, %s259
        $region40: #{tpu_custom_call.1} parent=31 // pred_fallthru
          _
      $region32: #{tpu_custom_call.1} parent=5 // pred_fallthru
        _
      %p277 = scmp.le.s32.totalorder 2, %s15
      // Predicated region
      $region41: #{tpu_custom_call.1} parent=5 // pred_check
        %p278 = pneg %p277
      $region42: #{tpu_custom_call.1} parent=5 // pred_check_branch
        %280 = sbr.rel (%p278) target = $region44
      $region43: #{tpu_custom_call.1} parent=5 // pred_region
        %s281 = ssub.s32 %s15, 2
        // Predicated region
        $region45: #{tpu_custom_call.1} parent=43 // pred_check
          %p282 = pneg %p140
        $region46: #{tpu_custom_call.1} parent=43 // pred_check_branch
          %284 = sbr.rel (%p282) target = $region48
        $region47: #{tpu_custom_call.1} parent=43 // pred_region
          %s285 = sand.u32 %s125, 1
          %s286 = scalar_lea.sflag [#allocation4], %s285
          %s287 = sand.u32 %s125, 1
          %s288 = smul.addr %s287, 2
          %s289 = scalar_lea.vmem [#allocation5], %s288
          %290 = dma.done %s286, 32
        $region48: #{tpu_custom_call.1} parent=43 // pred_fallthru
          _
      $region44: #{tpu_custom_call.1} parent=5 // pred_fallthru
        _
    $region6: #{tpu_custom_call.1} parent=1 // loop_footer
      %s19 = sadd.s32 1, %s15
    $region7: #{tpu_custom_call.1} parent=1 // loop_footer_branch
      %14 = sbr.rel target = $region3
    $region8: #{tpu_custom_call.1} parent=1 // loop_exit
      _
    %291 = vsyncpa [#allocation3], 1
    %s292 = scalar_lea.sflag [#allocation3], 1
    %293 = vsyncpa %s292, 1
    %294 = vsyncpa [#allocation4], 1
    %s295 = scalar_lea.sflag [#allocation4], 1
    %296 = vsyncpa %s295, 1

</llo_original>
